<compile_context>
chip_gen: v7x
topology: tpu7x:2x2x1
jax: 0.10.0
libtpu: 0.0.40
codegen_flags: <defaults>
</compile_context>

<pallas_src>
import jax
import jax.numpy as jnp
from jax.experimental import pallas as pl
from jax.experimental.pallas import tpu as pltpu

HIDDEN = 256  # fixed by the module: nn.Linear(256, 256)


# ---------------------------------------------------------------------------
# Pallas kernels (channel-wise affine modulation; pure HBM-bound streaming)
# ---------------------------------------------------------------------------
def _modulate_rowscalar_kernel(gb_ref, x_ref, out_ref):
    """out = gamma * x + beta on a (tm, tl) tile of the (N*C, H*W) slab.

    gb_ref is a (tm, 2) tile: column 0 = gamma, column 1 = beta (per row)."""
    gamma = gb_ref[:, 0:1]
    beta = gb_ref[:, 1:2]
    out_ref[...] = (gamma * x_ref[...].astype(jnp.float32)
                    + beta).astype(out_ref.dtype)


def _modulate_dense_kernel(g_ref, b_ref, x_ref, out_ref):
    """Small-H*W path: slab is (N, C*H*W); g/b already expanded per-lane."""
    out_ref[...] = (g_ref[...] * x_ref[...].astype(jnp.float32)
                    + b_ref[...]).astype(out_ref.dtype)


# ---------------------------------------------------------------------------
# Tiling / VMEM planning
# ---------------------------------------------------------------------------
def _vmem_capacity_bytes():
    try:
        return int(pltpu.get_tpu_info().vmem_capacity_bytes)
    except Exception:
        return 64 << 20  # conservative fallback: v7x per-TensorCore VMEM


def _pick_tile(total, cap, align):
    """Largest tile <= cap; full extent if the array already fits."""
    if total <= cap:
        return total
    return max(align, (cap // align) * align)


def _plan(rows, lanes, itemsize, n_streams):
    """Choose (tm, tl, grid, vmem_limit_bytes) for a rows x lanes streaming slab."""
    vmem_cap = _vmem_capacity_bytes()
    # Per-tile byte budget ~ VMEM/16: 4 MiB on 64 MiB parts (v7x),
    # 8 MiB on 128 MiB parts (v5e/v6e).  n_streams tiles get double-buffered.
    tile_budget = max(1 << 20, min(16 << 20, vmem_cap // 16))

    row_align = max(8, 32 // itemsize)          # 8 for f32, 16 for bf16
    tm = _pick_tile(rows, 512, row_align)
    tl_cap = max(128, (tile_budget // max(1, tm * itemsize)) // 128 * 128)
    tl = _pick_tile(lanes, tl_cap, 128)

    # Guarantee >= 2 blocks along at least one "parallel" axis so both v7x
    # TensorCores receive work (negligible cost on single-core parts).
    if pl.cdiv(rows, tm) == 1 and pl.cdiv(lanes, tl) == 1:
        if rows >= 2 * row_align:
            tm = max(row_align, (tm // 2) // row_align * row_align)
        elif lanes >= 2 * 128:
            tl = max(128, (tl // 2) // 128 * 128)

    grid = (pl.cdiv(rows, tm), pl.cdiv(lanes, tl))

    # VMEM limit: double-buffered streamed tiles (worst-case f32) + padded
    # per-row scalar tiles + headroom; clamped well below physical capacity.
    need = 2 * n_streams * tm * tl * 4 + 2 * tm * 128 * 4 + (4 << 20)
    vmem_limit = int(min(vmem_cap * 3 // 4, max(need, 16 << 20)))
    return tm, tl, grid, vmem_limit


# ---------------------------------------------------------------------------
# Wrapper (forward pass)
# ---------------------------------------------------------------------------
def affine_forward(x_nchw, y, params):
    """x_nchw: (N, C, H, W); y: (N, 256). Returns gamma(y) * x + beta(y)."""
    N, C, H, W = x_nchw.shape
    HW = H * W
    w1g, b1g, w2g, b2g, w1b, b1b, w2b, b2b = params

    # --- tiny gamma/beta MLP: plain jnp (per perf review: not worth a launch) ---
    yf = y.astype(jnp.float32)
    hg = jnp.maximum(jnp.dot(yf, w1g) + b1g, 0.0)
    hb = jnp.maximum(jnp.dot(yf, w1b) + b1b, 0.0)
    gamma = jnp.dot(hg, w2g) + b2g            # (N, C) f32
    beta = jnp.dot(hb, w2b) + b2b             # (N, C) f32

    out_dtype = x_nchw.dtype
    itemsize = jnp.dtype(out_dtype).itemsize
    semantics = ("parallel", "parallel")

    if HW >= 128:
        # Lane-dense slab (N*C, H*W); per-row scalars packed into one (N*C, 2).
        rows, lanes = N * C, HW
        x_flat = x_nchw.reshape(rows, lanes)
        gb = jnp.stack([gamma.reshape(-1), beta.reshape(-1)], axis=-1)  # (NC, 2)
        tm, tl, grid, vmem_limit = _plan(rows, lanes, itemsize, n_streams=2)
        out_flat = pl.pallas_call(
            _modulate_rowscalar_kernel,
            out_shape=jax.ShapeDtypeStruct((rows, lanes), out_dtype),
            grid=grid,
            in_specs=[
                pl.BlockSpec((tm, 2), lambda i, j: (i, 0)),    # gamma | beta
                pl.BlockSpec((tm, tl), lambda i, j: (i, j)),   # x tile
            ],
            out_specs=pl.BlockSpec((tm, tl), lambda i, j: (i, j)),
            compiler_params=pltpu.CompilerParams(
                dimension_semantics=semantics,
                vmem_limit_bytes=vmem_limit,
            ),
        )(gb, x_flat)
    else:
        # Small feature maps (e.g. 4x4 / 8x8 stages): flatten to (N, C*H*W)
        # and pre-expand gamma/beta to per-lane vectors so stores stay
        # lane-dense.  The extra gamma/beta traffic is tiny at these sizes.
        rows, lanes = N, C * HW
        x_flat = x_nchw.reshape(rows, lanes)
        g_exp = jnp.repeat(gamma, HW, axis=1)  # (N, C*HW): lane = c*HW + hw
        b_exp = jnp.repeat(beta, HW, axis=1)
        tm, tl, grid, vmem_limit = _plan(rows, lanes, itemsize, n_streams=4)
        tile = pl.BlockSpec((tm, tl), lambda i, j: (i, j))
        out_flat = pl.pallas_call(
            _modulate_dense_kernel,
            out_shape=jax.ShapeDtypeStruct((rows, lanes), out_dtype),
            grid=grid,
            in_specs=[tile, tile, tile],
            out_specs=tile,
            compiler_params=pltpu.CompilerParams(
                dimension_semantics=semantics,
                vmem_limit_bytes=vmem_limit,
            ),
        )(g_exp, b_exp, x_flat)

    return out_flat.reshape(N, C, H, W)


affine_forward_jit = jax.jit(affine_forward)


# ---------------------------------------------------------------------------
# Params & pure-JAX reference
# ---------------------------------------------------------------------------
def init_params(key, num_features, randomize_linear2=False):
    """Weights stored (in, out) so forward computes y @ W + b.

    Layer 1: PyTorch-default uniform(+-1/sqrt(256)).  Layer 2 follows the
    module's _initialize(): zero weights, gamma bias = 1, beta bias = 0 --
    unless randomize_linear2=True (used to actually exercise the MLP path)."""
    ks = jax.random.split(key, 8)
    bound = 1.0 / float(HIDDEN ** 0.5)
    u = lambda k, shape: jax.random.uniform(k, shape, jnp.float32, -bound, bound)

    w1g, b1g = u(ks[0], (HIDDEN, HIDDEN)), u(ks[1], (1, HIDDEN))
    w1b, b1b = u(ks[2], (HIDDEN, HIDDEN)), u(ks[3], (1, HIDDEN))
    if randomize_linear2:
        w2g, b2g = u(ks[4], (HIDDEN, num_features)), u(ks[5], (1, num_features))
        w2b, b2b = u(ks[6], (HIDDEN, num_features)), u(ks[7], (1, num_features))
    else:
        w2g = jnp.zeros((HIDDEN, num_features), jnp.float32)   # zeros_
        b2g = jnp.ones((1, num_features), jnp.float32)         # ones_
        w2b = jnp.zeros((HIDDEN, num_features), jnp.float32)   # zeros_
        b2b = jnp.zeros((1, num_features), jnp.float32)        # zeros_
    return (w1g, b1g, w2g, b2g, w1b, b1b, w2b, b2b)


def affine_ref(x_nchw, y, params):
    """Pure-JAX reference for validation."""
    w1g, b1g, w2g, b2g, w1b, b1b, w2b, b2b = params
    hg = jnp.maximum(y @ w1g + b1g, 0.0)
    hb = jnp.maximum(y @ w1b + b1b, 0.0)
    gamma = hg @ w2g + b2g
    beta = hb @ w2b + b2b
    return gamma[:, :, None, None] * x_nchw + beta[:, :, None, None]


# ---------------------------------------------------------------------------
# Self-test
# ---------------------------------------------------------------------------
if __name__ == "__main__":
    key = jax.random.PRNGKey(0)
    kx, ky, kp, kq, kx2, ky2 = jax.random.split(key, 6)

    # (a) 16x16 feature map (H*W >= 128 path), module-default init.
    N, C, H, W = 2, 4, 16, 16
    x = jax.random.normal(kx, (N, C, H, W), jnp.float32)
    y = jax.random.normal(ky, (N, HIDDEN), jnp.float32)
    params = init_params(kp, num_features=C, randomize_linear2=False)
    out = jax.block_until_ready(affine_forward_jit(x, y, params))
    assert out.shape == (N, C, H, W)
    assert jnp.allclose(out, affine_ref(x, y, params), atol=1e-4, rtol=1e-4), \
        "mismatch vs reference (default init)"

    # (b) same shapes, randomized linear2 so the gamma/beta MLP actually matters.
    params_r = init_params(kq, num_features=C, randomize_linear2=True)
    out_r = jax.block_until_ready(affine_forward_jit(x, y, params_r))
    assert jnp.allclose(out_r, affine_ref(x, y, params_r), atol=1e-4, rtol=1e-4), \
        "mismatch vs reference (random linear2)"

    # (c) small feature map (H*W < 128) exercises the lane-dense (N, C*H*W) path.
    N2, C2, H2, W2 = 2, 8, 8, 8
    x2 = jax.random.normal(kx2, (N2, C2, H2, W2), jnp.float32)
    y2 = jax.random.normal(ky2, (N2, HIDDEN), jnp.float32)
    params2 = init_params(kq, num_features=C2, randomize_linear2=True)
    out2 = jax.block_until_ready(affine_forward_jit(x2, y2, params2))
    assert jnp.allclose(out2, affine_ref(x2, y2, params2), atol=1e-4, rtol=1e-4), \
        "mismatch vs reference (small H*W path)"

    print("KERNEL_OK")
</pallas_src>

<mosaic_0001>
module attributes {stable_mosaic.version = 11 : i64} {
  func.func @_modulate_rowscalar_kernel(%arg0: i32, %arg1: i32, %arg2: memref<8x2xf32, #tpu.memory_space<vmem>>, %arg3: memref<8x128xf32, #tpu.memory_space<vmem>>, %arg4: memref<8x128xf32, #tpu.memory_space<vmem>>) attributes {dimension_semantics = [#tpu.dimension_semantics<parallel>, #tpu.dimension_semantics<parallel>], iteration_bounds = array<i64: 1, 2>, scalar_prefetch = 0 : i64, scratch_operands = 0 : i64, tpu.core_type = #tpu.core_type<tc>, window_params = [{transform_indices = @transform_0, window_bounds = array<i64: 8, 2>}, {transform_indices = @transform_1, window_bounds = array<i64: 8, 128>}, {transform_indices = @transform_2, window_bounds = array<i64: 8, 128>}]} {
    %c0 = arith.constant 0 : index
    %c0_0 = arith.constant 0 : index
    %0 = vector.load %arg2[%c0, %c0_0] : memref<8x2xf32, #tpu.memory_space<vmem>>, vector<8x1xf32>
    %c0_1 = arith.constant 0 : index
    %c1 = arith.constant 1 : index
    %1 = vector.load %arg2[%c0_1, %c1] : memref<8x2xf32, #tpu.memory_space<vmem>>, vector<8x1xf32>
    %c0_2 = arith.constant 0 : index
    %c0_3 = arith.constant 0 : index
    %2 = vector.load %arg3[%c0_2, %c0_3] : memref<8x128xf32, #tpu.memory_space<vmem>>, vector<8x128xf32>
    %3 = vector.broadcast %0 : vector<8x1xf32> to vector<8x128xf32>
    %4 = arith.mulf %3, %2 : vector<8x128xf32>
    %5 = vector.broadcast %1 : vector<8x1xf32> to vector<8x128xf32>
    %6 = arith.addf %4, %5 : vector<8x128xf32>
    %c0_4 = arith.constant 0 : index
    %c0_5 = arith.constant 0 : index
    %7 = vector.load %arg4[%c0_4, %c0_5] : memref<8x128xf32, #tpu.memory_space<vmem>>, vector<8x128xf32>
    tpu.vector_store %arg4[%c0_4, %c0_5], %6 {strides = array<i32>} : memref<8x128xf32, #tpu.memory_space<vmem>>, vector<8x128xf32>,
    return
  }
  func.func @transform_0(%arg0: i32, %arg1: i32) -> (i32, i32) {
    %c0_i32 = arith.constant 0 : i32
    %c0_i32_0 = arith.constant 0 : i32
    return %arg0, %c0_i32 : i32, i32
  }
  func.func @transform_1(%arg0: i32, %arg1: i32) -> (i32, i32) {
    %c0_i32 = arith.constant 0 : i32
    return %arg0, %arg1 : i32, i32
  }
  func.func @transform_2(%arg0: i32, %arg1: i32) -> (i32, i32) {
    %c0_i32 = arith.constant 0 : i32
    return %arg0, %arg1 : i32, i32
  }
}

</mosaic_0001>

<llo_original>
// kernel: affine_forward.1
$region0: #{affine_forward.1}
  #allocation0 [shape = 'u32[]', space=smem, size = 0x4, offset = 0x4, fixed_abs, tag = 'smem constant byte address 0x4 - core index']
  #allocation1 [shape = 'u32[144,128]{1,0:T(1,128)}', space=vmem, size = 0x12000, scoped, tag = 'internal scratch']
  %s0 = inlined_call_operand.vmem [shape: f32[8,2], index: 0, kind: input, shape index: {}]
  %s1 = inlined_call_operand.vmem [shape: f32[8,256], index: 1, kind: input, shape index: {}]
  %s2 = inlined_call_operand.vmem [shape: f32[8,256], index: 2, kind: output, shape index: {}]
  %s3 = sld [smem:[#allocation0]]
  $region41: #{affine_forward.1} parent=0
    _
  %s5 = ssub.s32 1, %s3
  %s6 = scalar_select 0, %s5, %s3
  loop: start=0, step=1, limit=4
  $region2: #{affine_forward.1} parent=0 // loop_pre_header
    _
  $region3: #{affine_forward.1} parent=0 // loop_header
    %s8 = sphi 0, %s12
    %p9 = scmp.ge.s32.totalorder %s8, 4
    %s15 = sphi 0, %s27
    %s16 = sphi 0, %s23
    %s17 = sphi 0, %s15
    %s18 = sphi 0, %s16
    %s19 = sphi 0, %s17
    %s20 = sphi 0, %s18
    %s30 = sphi 0, %s32
    %s33 = sphi 0, %s30
    %s34 = sphi 0, %s33
    %s50 = sphi 0, %s34
    %s58 = sphi 0, %s60
    %s61 = sphi 0, %s58
    %s62 = sphi 0, %s61
    %s78 = sphi 0, %s62
    %s86 = sphi 0, %s88
    %s89 = sphi 0, %s86
    %s90 = sphi 0, %s89
    %s106 = sphi 0, %s90
  $region4: #{affine_forward.1} parent=0 // loop_header_branch
    %11 = sbr.rel (%p9) target = $region8
  $region5: #{affine_forward.1} parent=0 // loop_body
    %s13 = ssub.s32 %s8, 1
    %s14 = ssub.s32 %s8, 2
    %s21 = sadd.s32 1, %s16
    %p22 = scmp.ge.s32.totalorder %s21, 2
    %s23 = scalar_select %p22, 0, %s21
    %s24 = sadd.s32 1, %s15
    %s25 = scalar_select %p22, %s24, %s15
    %p26 = scmp.ge.s32.totalorder %s25, 1
    %s27 = scalar_select %p26, 0, %s25
    %s28 = ssub.s32 %s15, %s27
    %p29 = scmp.eq.s32.totalorder %s28, 0
    %s31 = sadd.s32 %s30, 1
    %s32 = scalar_select %p29, %s30, %s31
    %p35 = pneg %p29
    %p36 = scmp.eq.s32.totalorder %s8, 1
    %p37 = por %p35, %p36
    %p38 = scmp.ne.s32.totalorder %s30, %s33
    %p39 = scmp.eq.s32.totalorder %s8, 0
    %p40 = por %p38, %p39
    %p41 = scmp.ne.s32.totalorder %s30, %s33
    %p42 = scmp.eq.s32.totalorder %s13, 1
    %p43 = por %p41, %p42
    %p44 = scmp.ne.s32.totalorder %s33, %s34
    %p45 = scmp.eq.s32.totalorder %s13, 0
    %p46 = por %p44, %p45
    %p47 = scmp.ne.s32.totalorder %s33, %s34
    %p48 = scmp.eq.s32.totalorder %s14, 1
    %p49 = por %p47, %p48
    %p51 = scmp.ne.s32.totalorder %s34, %s50
    %p52 = scmp.eq.s32.totalorder %s14, 0
    %p53 = por %p51, %p52
    %s54 = ssub.s32 %s15, %s27
    %s55 = ssub.s32 %s16, %s23
    %s56 = sor.u32 %s54, %s55
    %p57 = scmp.eq.s32.totalorder %s56, 0
    %s59 = sadd.s32 %s58, 1
    %s60 = scalar_select %p57, %s58, %s59
    %p63 = pneg %p57
    %p64 = scmp.eq.s32.totalorder %s8, 1
    %p65 = por %p63, %p64
    %p66 = scmp.ne.s32.totalorder %s58, %s61
    %p67 = scmp.eq.s32.totalorder %s8, 0
    %p68 = por %p66, %p67
    %p69 = scmp.ne.s32.totalorder %s58, %s61
    %p70 = scmp.eq.s32.totalorder %s13, 1
    %p71 = por %p69, %p70
    %p72 = scmp.ne.s32.totalorder %s61, %s62
    %p73 = scmp.eq.s32.totalorder %s13, 0
    %p74 = por %p72, %p73
    %p75 = scmp.ne.s32.totalorder %s61, %s62
    %p76 = scmp.eq.s32.totalorder %s14, 1
    %p77 = por %p75, %p76
    %p79 = scmp.ne.s32.totalorder %s62, %s78
    %p80 = scmp.eq.s32.totalorder %s14, 0
    %p81 = por %p79, %p80
    %s82 = ssub.s32 %s15, %s27
    %s83 = ssub.s32 %s16, %s23
    %s84 = sor.u32 %s82, %s83
    %p85 = scmp.eq.s32.totalorder %s84, 0
    %s87 = sadd.s32 %s86, 1
    %s88 = scalar_select %p85, %s86, %s87
    %p91 = pneg %p85
    %p92 = scmp.eq.s32.totalorder %s8, 1
    %p93 = por %p91, %p92
    %p94 = scmp.ne.s32.totalorder %s86, %s89
    %p95 = scmp.eq.s32.totalorder %s8, 0
    %p96 = por %p94, %p95
    %p97 = scmp.ne.s32.totalorder %s86, %s89
    %p98 = scmp.eq.s32.totalorder %s13, 1
    %p99 = por %p97, %p98
    %p100 = scmp.ne.s32.totalorder %s89, %s90
    %p101 = scmp.eq.s32.totalorder %s13, 0
    %p102 = por %p100, %p101
    %p103 = scmp.ne.s32.totalorder %s89, %s90
    %p104 = scmp.eq.s32.totalorder %s14, 1
    %p105 = por %p103, %p104
    %p107 = scmp.ne.s32.totalorder %s90, %s106
    %p108 = scmp.eq.s32.totalorder %s14, 0
    %p109 = por %p107, %p108
    %p110 = scmp.le.s32.totalorder 1, %s8
    %p111 = scmp.lt.s32.totalorder %s8, 3
    %p112 = pnand %p110, %p111
    %p113 = pneg %p112
    // Predicated region
    $region9: #{affine_forward.1} parent=5 // pred_check
      _
    $region10: #{affine_forward.1} parent=5 // pred_check_branch
      %115 = sbr.rel (%p112) target = $region12
    $region11: #{affine_forward.1} parent=5 // pred_region
      %s116 = ssub.s32 %s8, 1
      // Predicated region
      $region13: #{affine_forward.1} parent=11 // pred_check
        %p117 = pneg %p46
      $region14: #{affine_forward.1} parent=11 // pred_check_branch
        %119 = sbr.rel (%p117) target = $region16
      $region15: #{affine_forward.1} parent=11 // pred_region
        %p120 = scmp.lt.s32.totalorder %s17, 0
        %s121 = scalar_select %p120, %s17, 0
        %s122 = smul.addr %s121, 8
        %s123 = scalar_lea.vmem %s0, %s122
      $region16: #{affine_forward.1} parent=11 // pred_fallthru
        _
    $region12: #{affine_forward.1} parent=5 // pred_fallthru
      _
    %p124 = scmp.lt.s32.totalorder %s8, 2
    // Predicated region
    $region17: #{affine_forward.1} parent=5 // pred_check
      %p125 = pneg %p124
    $region18: #{affine_forward.1} parent=5 // pred_check_branch
      %127 = sbr.rel (%p125) target = $region20
    $region19: #{affine_forward.1} parent=5 // pred_region
      // Predicated region
      $region21: #{affine_forward.1} parent=19 // pred_check
        %p128 = pneg %p68
      $region22: #{affine_forward.1} parent=19 // pred_check_branch
        %130 = sbr.rel (%p128) target = $region24
      $region23: #{affine_forward.1} parent=19 // pred_region
        %p131 = scmp.lt.s32.totalorder %s15, 0
        %s132 = scalar_select %p131, %s15, 0
        %p133 = scmp.lt.s32.totalorder %s16, 1
        %s134 = scalar_select %p133, %s16, 1
        %s135 = smul.addr %s132, 2
        %s136 = sadd.s32 %s134, %s135
        %s137 = smul.addr %s136, 8
        %s138 = scalar_lea.vmem %s1, %s137
      $region24: #{affine_forward.1} parent=19 // pred_fallthru
        _
    $region20: #{affine_forward.1} parent=5 // pred_fallthru
      _
    %p139 = scmp.le.s32.totalorder 1, %s8
    %p140 = scmp.lt.s32.totalorder %s8, 3
    %p141 = pnand %p139, %p140
    %p142 = pneg %p141
    // Predicated region
    $region25: #{affine_forward.1} parent=5 // pred_check
      _
    $region26: #{affine_forward.1} parent=5 // pred_check_branch
      %144 = sbr.rel (%p141) target = $region28
    $region27: #{affine_forward.1} parent=5 // pred_region
      %s145 = ssub.s32 %s8, 1
      %p146 = scmp.lt.s32.totalorder %s17, 0
      %s147 = scalar_select %p146, %s17, 0
      %s148 = smul.addr %s147, 8
      %s149 = scalar_lea.vmem %s0, %s148
      %p150 = pneg %p46
      %p151 = pneg %p43
      %p152 = scmp.lt.s32.totalorder %s17, 0
      %s153 = scalar_select %p152, %s17, 0
      %p154 = scmp.lt.s32.totalorder %s18, 1
      %s155 = scalar_select %p154, %s18, 1
      %s156 = smul.addr %s153, 2
      %s157 = sadd.s32 %s155, %s156
      %s158 = smul.addr %s157, 8
      %s159 = scalar_lea.vmem %s1, %s158
      %p160 = pneg %p74
      %p161 = pneg %p71
      %p162 = pneg %p102
      %p163 = pneg %p99
      %p164 = scmp.lt.s32.totalorder %s17, 0
      %s165 = scalar_select %p164, %s17, 0
      %p166 = scmp.lt.s32.totalorder %s18, 1
      %s167 = scalar_select %p166, %s18, 1
      %s168 = smul.addr %s165, 2
      %s169 = sadd.s32 %s167, %s168
      %s170 = smul.addr %s169, 8
      %s171 = scalar_lea.vmem %s2, %s170
      %p172 = scmp.lt.s32.totalorder %s17, 0
      %s173 = scalar_select %p172, %s17, 0
      %s174 = smul.addr %s173, 8
      %s175 = scalar_lea.vmem %s0, %s174
      %p176 = scmp.lt.s32.totalorder %s17, 0
      %s177 = scalar_select %p176, %s17, 0
      %p178 = scmp.lt.s32.totalorder %s18, 1
      %s179 = scalar_select %p178, %s18, 1
      %s180 = smul.addr %s177, 2
      %s181 = sadd.s32 %s179, %s180
      %s182 = smul.addr %s181, 8
      %s183 = scalar_lea.vmem %s1, %s182
      %p184 = scmp.lt.s32.totalorder %s17, 0
      %s185 = scalar_select %p184, %s17, 0
      %p186 = scmp.lt.s32.totalorder %s18, 1
      %s187 = scalar_select %p186, %s18, 1
      %s188 = smul.addr %s185, 2
      %s189 = sadd.s32 %s187, %s188
      %s190 = smul.addr %s189, 8
      %s191 = scalar_lea.vmem %s2, %s190
      %v192 = vld [vmem:[%s175] sm:$0xff]
      %v193 = vld [vmem:[%s183] sm:$0xff]
      %195 = vset.pattern.permute.xlu0 0
      %196 = vperm.xlu0 %195, %v192
      %v197 = vpop.permute.xlu0 %196
      %v199 = vmul.f32 %v197, %v193
      %200 = vset.pattern.permute.xlu0 1
      %201 = vperm.xlu0 %200, %v192
      %v202 = vpop.permute.xlu0 %201
      %v204 = vadd.f32 %v199, %v202
      %205 = vst [vmem:[%s191] sm:$0xff] %v204
      %p206 = scmp.lt.s32.totalorder %s17, 0
      %s207 = scalar_select %p206, %s17, 0
      %p208 = scmp.lt.s32.totalorder %s18, 1
      %s209 = scalar_select %p208, %s18, 1
      %s210 = smul.addr %s207, 2
      %s211 = sadd.s32 %s209, %s210
      %s212 = smul.addr %s211, 8
      %s213 = scalar_lea.vmem %s2, %s212
      // Predicated region
      $region29: #{affine_forward.1} parent=27 // pred_check
        %p214 = pneg %p99
      $region30: #{affine_forward.1} parent=27 // pred_check_branch
        %216 = sbr.rel (%p214) target = $region32
      $region31: #{affine_forward.1} parent=27 // pred_region
        _
      $region32: #{affine_forward.1} parent=27 // pred_fallthru
        _
    $region28: #{affine_forward.1} parent=5 // pred_fallthru
      _
    %p217 = scmp.le.s32.totalorder 2, %s8
    // Predicated region
    $region33: #{affine_forward.1} parent=5 // pred_check
      %p218 = pneg %p217
    $region34: #{affine_forward.1} parent=5 // pred_check_branch
      %220 = sbr.rel (%p218) target = $region36
    $region35: #{affine_forward.1} parent=5 // pred_region
      %s221 = ssub.s32 %s8, 2
      // Predicated region
      $region37: #{affine_forward.1} parent=35 // pred_check
        %p222 = pneg %p105
      $region38: #{affine_forward.1} parent=35 // pred_check_branch
        %224 = sbr.rel (%p222) target = $region40
      $region39: #{affine_forward.1} parent=35 // pred_region
        %p225 = scmp.lt.s32.totalorder %s19, 0
        %s226 = scalar_select %p225, %s19, 0
        %p227 = scmp.lt.s32.totalorder %s20, 1
        %s228 = scalar_select %p227, %s20, 1
        %s229 = smul.addr %s226, 2
        %s230 = sadd.s32 %s228, %s229
        %s231 = smul.addr %s230, 8
        %s232 = scalar_lea.vmem %s2, %s231
      $region40: #{affine_forward.1} parent=35 // pred_fallthru
        _
    $region36: #{affine_forward.1} parent=5 // pred_fallthru
      _
  $region6: #{affine_forward.1} parent=0 // loop_footer
    %s12 = sadd.s32 1, %s8
  $region7: #{affine_forward.1} parent=0 // loop_footer_branch
    %7 = sbr.rel target = $region3
  $region8: #{affine_forward.1} parent=0 // loop_exit
    _

</llo_original>
